<compile_context>
chip_gen: v6e
topology: v6e:2x2x1
jax: 0.10.0
libtpu: 0.0.40
codegen_flags: <defaults>
</compile_context>

<pallas_src>
import functools

import jax
import jax.numpy as jnp
from jax.experimental import pallas as pl
from jax.experimental.pallas import tpu as pltpu


def _resblock_kernel(x_ref, w1_ref, b1_ref, w2_ref, b2_ref, o_ref, *,
                     res_scale, H):
    NH, WC = x_ref.shape
    x = x_ref[...]                                   # (N*H, W*C) f32

    # Row-validity masks for the vertical taps (replaces zero padding in H and
    # masks wrap-around across image boundaries in the flattened N*H axis).
    h_id = jax.lax.broadcasted_iota(jnp.int32, (NH, 1), 0) % H
    up_ok = h_id >= 1                                # reading row h-1 is valid
    dn_ok = h_id <= H - 2                            # reading row h+1 is valid

    def conv(v, w_ref, b_ref):
        # Vertical shifts via XLU roll + VPU mask.
        v_up = jnp.where(up_ok, pltpu.roll(v, 1, axis=0), 0.0)       # in[h-1]
        v_dn = jnp.where(dn_ok, pltpu.roll(v, NH - 1, axis=0), 0.0)  # in[h+1]
        # Bias folded into the accumulator init.
        acc = jnp.broadcast_to(b_ref[...], (NH, WC)).astype(jnp.float32)
        acc = acc + jnp.dot(v_up, w_ref[0], preferred_element_type=jnp.float32)
        acc = acc + jnp.dot(v,    w_ref[1], preferred_element_type=jnp.float32)
        acc = acc + jnp.dot(v_dn, w_ref[2], preferred_element_type=jnp.float32)
        return acc

    h1 = jnp.maximum(conv(x, w1_ref, b1_ref), 0.0)   # conv1 + ReLU
    res = conv(h1, w2_ref, b2_ref)                   # conv2
    o_ref[...] = (res * res_scale + x).astype(o_ref.dtype)


def _banded_weights(w, W):
    """Fold the horizontal taps + channel mixing of an HWIO (K, K, C, Co) conv
    weight into K banded (W*C, W*Co) matrices (one per vertical tap ky).

    band[ky][wi*C + cin, wo*Co + cout] = w[ky, wi - wo + pad, cin, cout]
    (zero outside the band), so out[:, wo*Co + cout] = x_shifted @ band[ky]
    implements the horizontal conv with implicit zero padding along W.
    """
    K, _, C, Co = w.shape
    pad = (K - 1) // 2
    wi = jnp.arange(W)[:, None]
    wo = jnp.arange(W)[None, :]
    kx = wi - wo + pad                                    # (W, W)
    valid = ((kx >= 0) & (kx < K)).astype(w.dtype)
    band = w[:, jnp.clip(kx, 0, K - 1)]                   # (K, W, W, C, Co)
    band = band * valid[None, :, :, None, None]
    band = jnp.transpose(band, (0, 1, 3, 2, 4))           # (K, W, C, W, Co)
    return band.reshape(K, W * C, W * Co)


def resblock_forward(x_nchw, w1, b1, w2, b2, res_scale=1.0):
    """x_nchw: (N, C, H, W); w: (K, K, Cin, Cout) (HWIO); b: (Cout,)."""
    N, C, H, W = x_nchw.shape
    K = w1.shape[0]
    WC = W * C
    NH = N * H

    # NCHW -> lane-dense (N*H, W*C); single fused transpose+reshape in XLA.
    x2 = jnp.transpose(x_nchw, (0, 2, 3, 1)).reshape(NH, WC).astype(jnp.float32)
    wb1 = _banded_weights(w1.astype(jnp.float32), W)      # (K, WC, WC)
    wb2 = _banded_weights(w2.astype(jnp.float32), W)
    b1r = jnp.tile(b1.astype(jnp.float32), W).reshape(1, WC)
    b2r = jnp.tile(b2.astype(jnp.float32), W).reshape(1, WC)

    kernel = functools.partial(_resblock_kernel,
                               res_scale=float(res_scale), H=H)

    out2 = pl.pallas_call(
        kernel,
        out_shape=jax.ShapeDtypeStruct((NH, WC), jnp.float32),
        grid_spec=pltpu.PrefetchScalarGridSpec(
            num_scalar_prefetch=0,
            grid=(1,),
            in_specs=[
                pl.BlockSpec((NH, WC), lambda i: (0, 0)),        # x (lane-dense)
                pl.BlockSpec((K, WC, WC), lambda i: (0, 0, 0)),  # banded w1
                pl.BlockSpec((1, WC), lambda i: (0, 0)),         # b1 (tiled)
                pl.BlockSpec((K, WC, WC), lambda i: (0, 0, 0)),  # banded w2
                pl.BlockSpec((1, WC), lambda i: (0, 0)),         # b2 (tiled)
            ],
            out_specs=pl.BlockSpec((NH, WC), lambda i: (0, 0)),
        ),
        compiler_params=pltpu.CompilerParams(
            dimension_semantics=("arbitrary",)),
    )(x2, wb1, b1r, wb2, b2r)

    out = out2.reshape(N, H, W, C)
    return jnp.transpose(out, (0, 3, 1, 2)).astype(x_nchw.dtype)


def ref_resblock(x_nchw, w1, b1, w2, b2, res_scale=1.0):
    """Pure-JAX reference (same semantics as the PyTorch module)."""
    dn = ('NHWC', 'HWIO', 'NHWC')
    x = jnp.transpose(x_nchw, (0, 2, 3, 1)).astype(jnp.float32)
    h = jax.lax.conv_general_dilated(
        x, w1, (1, 1), 'SAME', dimension_numbers=dn,
        precision=jax.lax.Precision.HIGHEST) + b1
    h = jnp.maximum(h, 0.0)
    h2 = jax.lax.conv_general_dilated(
        h, w2, (1, 1), 'SAME', dimension_numbers=dn,
        precision=jax.lax.Precision.HIGHEST) + b2
    out = h2 * res_scale + x
    return jnp.transpose(out, (0, 3, 1, 2))


if __name__ == "__main__":
    # ResBlock(conv, n_feat=8, kernel_size=3, padding=1, bias=True, bn=False,
    #          act=ReLU, res_scale=1).  C=8, W=16 -> lane dim W*C = 128.
    N, C, H, W, K = 2, 8, 16, 16, 3
    res_scale = 1.0

    key = jax.random.PRNGKey(0)
    kx, kw1, kb1, kw2, kb2 = jax.random.split(key, 5)

    x = jax.random.normal(kx, (N, C, H, W), jnp.float32)
    # Deterministic synthetic parameters (HWIO weight layout, bias per out-ch).
    w1 = jax.random.normal(kw1, (K, K, C, C), jnp.float32) * 0.1
    b1 = jax.random.normal(kb1, (C,), jnp.float32) * 0.1
    w2 = jax.random.normal(kw2, (K, K, C, C), jnp.float32) * 0.1
    b2 = jax.random.normal(kb2, (C,), jnp.float32) * 0.1

    out = resblock_forward(x, w1, b1, w2, b2, res_scale)
    out = jax.block_until_ready(out)

    ref = ref_resblock(x, w1, b1, w2, b2, res_scale)
    assert out.shape == (N, C, H, W)
    assert jnp.allclose(out, ref, atol=1e-4, rtol=1e-4), "mismatch vs reference"

    print("KERNEL_OK")
</pallas_src>

<mosaic_0001>
module attributes {stable_mosaic.version = 11 : i64} {
  func.func @_resblock_kernel(%arg0: i32, %arg1: memref<32x128xf32, #tpu.memory_space<vmem>>, %arg2: memref<3x128x128xf32, #tpu.memory_space<vmem>>, %arg3: memref<1x128xf32, #tpu.memory_space<vmem>>, %arg4: memref<3x128x128xf32, #tpu.memory_space<vmem>>, %arg5: memref<1x128xf32, #tpu.memory_space<vmem>>, %arg6: memref<32x128xf32, #tpu.memory_space<vmem>>) attributes {dimension_semantics = [#tpu.dimension_semantics<arbitrary>], iteration_bounds = array<i64: 1>, scalar_prefetch = 0 : i64, scratch_operands = 0 : i64, tpu.core_type = #tpu.core_type<tc>, window_params = [{pipeline_mode = #tpu.pipeline_mode<synchronous>, transform_indices = @transform_0, window_bounds = array<i64: 32, 128>}, {pipeline_mode = #tpu.pipeline_mode<synchronous>, transform_indices = @transform_1, window_bounds = array<i64: 3, 128, 128>}, {pipeline_mode = #tpu.pipeline_mode<synchronous>, transform_indices = @transform_2, window_bounds = array<i64: 1, 128>}, {pipeline_mode = #tpu.pipeline_mode<synchronous>, transform_indices = @transform_3, window_bounds = array<i64: 3, 128, 128>}, {pipeline_mode = #tpu.pipeline_mode<synchronous>, transform_indices = @transform_4, window_bounds = array<i64: 1, 128>}, {pipeline_mode = #tpu.pipeline_mode<synchronous>, transform_indices = @transform_5, window_bounds = array<i64: 32, 128>}]} {
    %c0 = arith.constant 0 : index
    %c0_0 = arith.constant 0 : index
    %0 = vector.load %arg1[%c0, %c0_0] : memref<32x128xf32, #tpu.memory_space<vmem>>, vector<32x128xf32>
    %1 = tpu.iota {dimensions = array<i32: 0>} : vector<32x1xi32>
    %c16_i32 = arith.constant 16 : i32
    %c0_i32 = arith.constant 0 : i32
    %2 = arith.cmpi eq, %c16_i32, %c0_i32 : i32
    %c1_i32 = arith.constant 1 : i32
    %3 = arith.select %2, %c1_i32, %c16_i32 : i32
    %4 = vector.broadcast %3 : i32 to vector<32x1xi32>
    %5 = arith.remsi %1, %4 : vector<32x1xi32>
    %c0_i32_1 = arith.constant 0 : i32
    %6 = vector.broadcast %c0_i32_1 : i32 to vector<32x1xi32>
    %7 = arith.cmpi ne, %5, %6 : vector<32x1xi32>
    %c0_i32_2 = arith.constant 0 : i32
    %8 = vector.broadcast %c0_i32_2 : i32 to vector<32x1xi32>
    %9 = arith.cmpi slt, %5, %8 : vector<32x1xi32>
    %c0_i32_3 = arith.constant 0 : i32
    %10 = arith.cmpi slt, %3, %c0_i32_3 : i32
    %11 = vector.broadcast %10 : i1 to vector<32x1xi1>
    %12 = vector.broadcast %11 : vector<32x1xi1> to vector<32x1xi1>
    %13 = arith.xori %9, %12 : vector<32x1xi1>
    %14 = arith.andi %13, %7 : vector<32x1xi1>
    %15 = vector.broadcast %3 : i32 to vector<32x1xi32>
    %16 = arith.addi %5, %15 : vector<32x1xi32>
    %17 = arith.select %14, %16, %5 : vector<32x1xi1>, vector<32x1xi32>
    %c1_i32_4 = arith.constant 1 : i32
    %18 = vector.broadcast %c1_i32_4 : i32 to vector<32x1xi32>
    %19 = arith.cmpi sge, %17, %18 : vector<32x1xi32>
    %c14_i32 = arith.constant 14 : i32
    %20 = vector.broadcast %c14_i32 : i32 to vector<32x1xi32>
    %21 = arith.cmpi sle, %17, %20 : vector<32x1xi32>
    %c1_i32_5 = arith.constant 1 : i32
    %22 = tpu.dynamic_rotate %0 by %c1_i32_5 dim 0 : vector<32x128xf32>, i32 -> vector<32x128xf32>
    %cst = arith.constant 0.000000e+00 : f32
    %23 = vector.shape_cast %19 : vector<32x1xi1> to vector<32x1xi1>
    %24 = vector.broadcast %23 : vector<32x1xi1> to vector<32x128xi1>
    %25 = vector.broadcast %cst : f32 to vector<32x128xf32>
    %26 = arith.select %24, %22, %25 : vector<32x128xi1>, vector<32x128xf32>
    %c31_i32 = arith.constant 31 : i32
    %27 = tpu.dynamic_rotate %0 by %c31_i32 dim 0 : vector<32x128xf32>, i32 -> vector<32x128xf32>
    %cst_6 = arith.constant 0.000000e+00 : f32
    %28 = vector.shape_cast %21 : vector<32x1xi1> to vector<32x1xi1>
    %29 = vector.broadcast %28 : vector<32x1xi1> to vector<32x128xi1>
    %30 = vector.broadcast %cst_6 : f32 to vector<32x128xf32>
    %31 = arith.select %29, %27, %30 : vector<32x128xi1>, vector<32x128xf32>
    %c0_7 = arith.constant 0 : index
    %c0_8 = arith.constant 0 : index
    %32 = vector.load %arg3[%c0_7, %c0_8] : memref<1x128xf32, #tpu.memory_space<vmem>>, vector<1x128xf32>
    %33 = vector.shape_cast %32 : vector<1x128xf32> to vector<1x128xf32>
    %34 = vector.broadcast %33 : vector<1x128xf32> to vector<32x128xf32>
    %c0_9 = arith.constant 0 : index
    %c0_10 = arith.constant 0 : index
    %c0_11 = arith.constant 0 : index
    %35 = vector.load %arg2[%c0_9, %c0_10, %c0_11] : memref<3x128x128xf32, #tpu.memory_space<vmem>>, vector<1x128x128xf32>
    %36 = vector.shape_cast %35 : vector<1x128x128xf32> to vector<128x128xf32>
    %cst_12 = arith.constant dense<0.000000e+00> : vector<32x128xf32>
    %37 = tpu.matmul %26, %36, %cst_12 {dimension_numbers = #tpu.dot_dimension_numbers<[1], [0], [0], [1], [0, 0, 1, 1], [], []>} : vector<32x128xf32>, vector<128x128xf32>, vector<32x128xf32> -> vector<32x128xf32>
    %38 = arith.addf %34, %37 : vector<32x128xf32>
    %c1 = arith.constant 1 : index
    %c0_13 = arith.constant 0 : index
    %c0_14 = arith.constant 0 : index
    %39 = vector.load %arg2[%c1, %c0_13, %c0_14] : memref<3x128x128xf32, #tpu.memory_space<vmem>>, vector<1x128x128xf32>
    %40 = vector.shape_cast %39 : vector<1x128x128xf32> to vector<128x128xf32>
    %cst_15 = arith.constant dense<0.000000e+00> : vector<32x128xf32>
    %41 = tpu.matmul %0, %40, %cst_15 {dimension_numbers = #tpu.dot_dimension_numbers<[1], [0], [0], [1], [0, 0, 1, 1], [], []>} : vector<32x128xf32>, vector<128x128xf32>, vector<32x128xf32> -> vector<32x128xf32>
    %42 = arith.addf %38, %41 : vector<32x128xf32>
    %c2 = arith.constant 2 : index
    %c0_16 = arith.constant 0 : index
    %c0_17 = arith.constant 0 : index
    %43 = vector.load %arg2[%c2, %c0_16, %c0_17] : memref<3x128x128xf32, #tpu.memory_space<vmem>>, vector<1x128x128xf32>
    %44 = vector.shape_cast %43 : vector<1x128x128xf32> to vector<128x128xf32>
    %cst_18 = arith.constant dense<0.000000e+00> : vector<32x128xf32>
    %45 = tpu.matmul %31, %44, %cst_18 {dimension_numbers = #tpu.dot_dimension_numbers<[1], [0], [0], [1], [0, 0, 1, 1], [], []>} : vector<32x128xf32>, vector<128x128xf32>, vector<32x128xf32> -> vector<32x128xf32>
    %46 = arith.addf %42, %45 : vector<32x128xf32>
    %cst_19 = arith.constant 0.000000e+00 : f32
    %47 = vector.broadcast %cst_19 : f32 to vector<32x128xf32>
    %48 = arith.maximumf %46, %47 : vector<32x128xf32>
    %c1_i32_20 = arith.constant 1 : i32
    %49 = tpu.dynamic_rotate %48 by %c1_i32_20 dim 0 : vector<32x128xf32>, i32 -> vector<32x128xf32>
    %cst_21 = arith.constant 0.000000e+00 : f32
    %50 = vector.shape_cast %19 : vector<32x1xi1> to vector<32x1xi1>
    %51 = vector.broadcast %50 : vector<32x1xi1> to vector<32x128xi1>
    %52 = vector.broadcast %cst_21 : f32 to vector<32x128xf32>
    %53 = arith.select %51, %49, %52 : vector<32x128xi1>, vector<32x128xf32>
    %c31_i32_22 = arith.constant 31 : i32
    %54 = tpu.dynamic_rotate %48 by %c31_i32_22 dim 0 : vector<32x128xf32>, i32 -> vector<32x128xf32>
    %cst_23 = arith.constant 0.000000e+00 : f32
    %55 = vector.shape_cast %21 : vector<32x1xi1> to vector<32x1xi1>
    %56 = vector.broadcast %55 : vector<32x1xi1> to vector<32x128xi1>
    %57 = vector.broadcast %cst_23 : f32 to vector<32x128xf32>
    %58 = arith.select %56, %54, %57 : vector<32x128xi1>, vector<32x128xf32>
    %c0_24 = arith.constant 0 : index
    %c0_25 = arith.constant 0 : index
    %59 = vector.load %arg5[%c0_24, %c0_25] : memref<1x128xf32, #tpu.memory_space<vmem>>, vector<1x128xf32>
    %60 = vector.shape_cast %59 : vector<1x128xf32> to vector<1x128xf32>
    %61 = vector.broadcast %60 : vector<1x128xf32> to vector<32x128xf32>
    %c0_26 = arith.constant 0 : index
    %c0_27 = arith.constant 0 : index
    %c0_28 = arith.constant 0 : index
    %62 = vector.load %arg4[%c0_26, %c0_27, %c0_28] : memref<3x128x128xf32, #tpu.memory_space<vmem>>, vector<1x128x128xf32>
    %63 = vector.shape_cast %62 : vector<1x128x128xf32> to vector<128x128xf32>
    %cst_29 = arith.constant dense<0.000000e+00> : vector<32x128xf32>
    %64 = tpu.matmul %53, %63, %cst_29 {dimension_numbers = #tpu.dot_dimension_numbers<[1], [0], [0], [1], [0, 0, 1, 1], [], []>} : vector<32x128xf32>, vector<128x128xf32>, vector<32x128xf32> -> vector<32x128xf32>
    %65 = arith.addf %61, %64 : vector<32x128xf32>
    %c1_30 = arith.constant 1 : index
    %c0_31 = arith.constant 0 : index
    %c0_32 = arith.constant 0 : index
    %66 = vector.load %arg4[%c1_30, %c0_31, %c0_32] : memref<3x128x128xf32, #tpu.memory_space<vmem>>, vector<1x128x128xf32>
    %67 = vector.shape_cast %66 : vector<1x128x128xf32> to vector<128x128xf32>
    %cst_33 = arith.constant dense<0.000000e+00> : vector<32x128xf32>
    %68 = tpu.matmul %48, %67, %cst_33 {dimension_numbers = #tpu.dot_dimension_numbers<[1], [0], [0], [1], [0, 0, 1, 1], [], []>} : vector<32x128xf32>, vector<128x128xf32>, vector<32x128xf32> -> vector<32x128xf32>
    %69 = arith.addf %65, %68 : vector<32x128xf32>
    %c2_34 = arith.constant 2 : index
    %c0_35 = arith.constant 0 : index
    %c0_36 = arith.constant 0 : index
    %70 = vector.load %arg4[%c2_34, %c0_35, %c0_36] : memref<3x128x128xf32, #tpu.memory_space<vmem>>, vector<1x128x128xf32>
    %71 = vector.shape_cast %70 : vector<1x128x128xf32> to vector<128x128xf32>
    %cst_37 = arith.constant dense<0.000000e+00> : vector<32x128xf32>
    %72 = tpu.matmul %58, %71, %cst_37 {dimension_numbers = #tpu.dot_dimension_numbers<[1], [0], [0], [1], [0, 0, 1, 1], [], []>} : vector<32x128xf32>, vector<128x128xf32>, vector<32x128xf32> -> vector<32x128xf32>
    %73 = arith.addf %69, %72 : vector<32x128xf32>
    %cst_38 = arith.constant 1.000000e+00 : f32
    %74 = vector.broadcast %cst_38 : f32 to vector<32x128xf32>
    %75 = arith.mulf %73, %74 : vector<32x128xf32>
    %76 = arith.addf %75, %0 : vector<32x128xf32>
    %c0_39 = arith.constant 0 : index
    %c0_40 = arith.constant 0 : index
    %77 = vector.load %arg6[%c0_39, %c0_40] : memref<32x128xf32, #tpu.memory_space<vmem>>, vector<32x128xf32>
    tpu.vector_store %arg6[%c0_39, %c0_40], %76 {strides = array<i32>} : memref<32x128xf32, #tpu.memory_space<vmem>>, vector<32x128xf32>,
    return
  }
  func.func @transform_0(%arg0: i32) -> (i32, i32) {
    %c0_i32 = arith.constant 0 : i32
    %c0_i32_0 = arith.constant 0 : i32
    %c0_i32_1 = arith.constant 0 : i32
    return %c0_i32, %c0_i32_0 : i32, i32
  }
  func.func @transform_1(%arg0: i32) -> (i32, i32, i32) {
    %c0_i32 = arith.constant 0 : i32
    %c0_i32_0 = arith.constant 0 : i32
    %c0_i32_1 = arith.constant 0 : i32
    %c0_i32_2 = arith.constant 0 : i32
    return %c0_i32, %c0_i32_0, %c0_i32_1 : i32, i32, i32
  }
  func.func @transform_2(%arg0: i32) -> (i32, i32) {
    %c0_i32 = arith.constant 0 : i32
    %c0_i32_0 = arith.constant 0 : i32
    %c0_i32_1 = arith.constant 0 : i32
    return %c0_i32, %c0_i32_0 : i32, i32
  }
  func.func @transform_3(%arg0: i32) -> (i32, i32, i32) {
    %c0_i32 = arith.constant 0 : i32
    %c0_i32_0 = arith.constant 0 : i32
    %c0_i32_1 = arith.constant 0 : i32
    %c0_i32_2 = arith.constant 0 : i32
    return %c0_i32, %c0_i32_0, %c0_i32_1 : i32, i32, i32
  }
  func.func @transform_4(%arg0: i32) -> (i32, i32) {
    %c0_i32 = arith.constant 0 : i32
    %c0_i32_0 = arith.constant 0 : i32
    %c0_i32_1 = arith.constant 0 : i32
    return %c0_i32, %c0_i32_0 : i32, i32
  }
  func.func @transform_5(%arg0: i32) -> (i32, i32) {
    %c0_i32 = arith.constant 0 : i32
    %c0_i32_0 = arith.constant 0 : i32
    %c0_i32_1 = arith.constant 0 : i32
    return %c0_i32, %c0_i32_0 : i32, i32
  }
}

</mosaic_0001>

<llo_original>
// kernel: tpu_custom_call.1
$region0: #{tpu_custom_call.1}
  #allocation0 [shape = 'u32[]', space=smem, size = 0x4, offset = 0x4, fixed_abs, tag = 'smem constant byte address 0x4 - core index']
  #allocation1 [shape = 'u32[144,128]{1,0:T(1,128)}', space=vmem, size = 0x12000, scoped, tag = 'internal scratch']
  %s0 = inlined_call_operand.hbm [shape: f32[32,128], index: 0, kind: input, shape index: {}]
  %s1 = inlined_call_operand.hbm [shape: f32[3,128,128], index: 1, kind: input, shape index: {}]
  %s2 = inlined_call_operand.vmem [shape: f32[1,128], index: 2, kind: input, shape index: {}]
  %s3 = inlined_call_operand.hbm [shape: f32[3,128,128], index: 3, kind: input, shape index: {}]
  %s4 = inlined_call_operand.vmem [shape: f32[1,128], index: 4, kind: input, shape index: {}]
  %s5 = inlined_call_operand.hbm [shape: f32[32,128], index: 5, kind: output, shape index: {}]
  %s6 = sld [smem:[#allocation0]]
  $region42: #{tpu_custom_call.1} parent=0
    _
  %s8 = ssub.s32 1, %s6
  %s9 = scalar_select 0, %s8, %s6
  $region1: #{tpu_custom_call.1} parent=0
    #allocation2 [shape = 'u8[16384]{0}', space=vmem, size = 0x4000, scoped, tag = 'input window, operand 0, single buffered']
    #allocation3 [shape = 's32[1]{0}', space=sflag, size = 0x4, scoped, tag = 'scoped memory for tpu_custom_call.1']
    #allocation4 [shape = 's32[1]{0}', space=sflag, size = 0x4, scoped, tag = 'scoped memory for tpu_custom_call.1']
    #allocation5 [shape = 'u8[196608]{0}', space=vmem, size = 0x30000, scoped, tag = 'input window, operand 1, single buffered']
    #allocation6 [shape = 's32[1]{0}', space=sflag, size = 0x4, scoped, tag = 'scoped memory for tpu_custom_call.1']
    #allocation7 [shape = 'u8[196608]{0}', space=vmem, size = 0x30000, scoped, tag = 'input window, operand 3, single buffered']
    #allocation8 [shape = 'u8[16384]{0}', space=vmem, size = 0x4000, scoped, tag = 'output window, operand 0, single buffered']
    %10 = vsyncpa [#allocation3], 0
    %11 = vsyncpa [#allocation6], 0
    %12 = vsyncpa [#allocation4], 0
    // Predicated region
    $region2: #{tpu_custom_call.1} parent=1 // pred_check
      _
    $region3: #{tpu_custom_call.1} parent=1 // pred_check_branch
      %14 = sbr.rel (0) target = $region5
    $region4: #{tpu_custom_call.1} parent=1 // pred_region
      %s16 = ssub.s32 512, 512
      %17 = vsyncadd [#allocation3], %s16
      %s18 = sshll.u32 [#allocation2], 4
      %s19 = int_to_ptr.vmem [resolvable:$true] %s18
      %24 = dma.hbm_to_vmem [thread:$0]  %s0, 512, %s19, [#allocation3], 128, 128, 8
    $region5: #{tpu_custom_call.1} parent=1 // pred_fallthru
      _
    // Predicated region
    $region6: #{tpu_custom_call.1} parent=1 // pred_check
      _
    $region7: #{tpu_custom_call.1} parent=1 // pred_check_branch
      %26 = sbr.rel (0) target = $region9
    $region8: #{tpu_custom_call.1} parent=1 // pred_region
      %s28 = ssub.s32 6144, 6144
      %29 = vsyncadd [#allocation6], %s28
      %s30 = sshll.u32 [#allocation5], 4
      %s31 = int_to_ptr.vmem [resolvable:$true] %s30
      %36 = dma.hbm_to_vmem [thread:$0]  %s1, 6144, %s31, [#allocation6], 128, 128, 8
    $region9: #{tpu_custom_call.1} parent=1 // pred_fallthru
      _
    // Predicated region
    $region10: #{tpu_custom_call.1} parent=1 // pred_check
      _
    $region11: #{tpu_custom_call.1} parent=1 // pred_check_branch
      %38 = sbr.rel (0) target = $region13
    $region12: #{tpu_custom_call.1} parent=1 // pred_region
      _
    $region13: #{tpu_custom_call.1} parent=1 // pred_fallthru
      _
    // Predicated region
    $region14: #{tpu_custom_call.1} parent=1 // pred_check
      _
    $region15: #{tpu_custom_call.1} parent=1 // pred_check_branch
      %40 = sbr.rel (0) target = $region17
    $region16: #{tpu_custom_call.1} parent=1 // pred_region
      %s42 = ssub.s32 6144, 6144
      %43 = vsyncadd [#allocation6], %s42
      %s44 = sshll.u32 [#allocation7], 4
      %s45 = int_to_ptr.vmem [resolvable:$true] %s44
      %50 = dma.hbm_to_vmem [thread:$0]  %s3, 6144, %s45, [#allocation6], 128, 128, 8
    $region17: #{tpu_custom_call.1} parent=1 // pred_fallthru
      _
    // Predicated region
    $region18: #{tpu_custom_call.1} parent=1 // pred_check
      _
    $region19: #{tpu_custom_call.1} parent=1 // pred_check_branch
      %52 = sbr.rel (0) target = $region21
    $region20: #{tpu_custom_call.1} parent=1 // pred_region
      _
    $region21: #{tpu_custom_call.1} parent=1 // pred_fallthru
      _
    // Predicated region
    $region22: #{tpu_custom_call.1} parent=1 // pred_check
      _
    $region23: #{tpu_custom_call.1} parent=1 // pred_check_branch
      %54 = sbr.rel (0) target = $region25
    $region24: #{tpu_custom_call.1} parent=1 // pred_region
      %55 = dma.done [#allocation3], 512
    $region25: #{tpu_custom_call.1} parent=1 // pred_fallthru
      _
    // Predicated region
    $region26: #{tpu_custom_call.1} parent=1 // pred_check
      _
    $region27: #{tpu_custom_call.1} parent=1 // pred_check_branch
      %57 = sbr.rel (0) target = $region29
    $region28: #{tpu_custom_call.1} parent=1 // pred_region
      %58 = dma.done [#allocation6], 6144
    $region29: #{tpu_custom_call.1} parent=1 // pred_fallthru
      _
    // Predicated region
    $region30: #{tpu_custom_call.1} parent=1 // pred_check
      _
    $region31: #{tpu_custom_call.1} parent=1 // pred_check_branch
      %60 = sbr.rel (0) target = $region33
    $region32: #{tpu_custom_call.1} parent=1 // pred_region
      %61 = dma.done [#allocation6], 6144
    $region33: #{tpu_custom_call.1} parent=1 // pred_fallthru
      _
    %v62 = vld [vmem:[#allocation2] sm:$0xff]
    %v63 = vld [vmem:[#allocation2 + $0x8] sm:$0xff]
    %v64 = vld [vmem:[#allocation2 + $0x10] sm:$0xff]
    %v65 = vld [vmem:[#allocation2 + $0x18] sm:$0xff]
    %v66 = vlaneseq
    %v67 = vshrl.u32 %v66, 7
    %v68 = vadd.s32 %v67, 8
    %v69 = vadd.s32 %v67, 16
    %v70 = vadd.s32 %v67, 24
    %vm71 = vcmp.lt.s32.totalorder %v67, 0
    %v72 = vsub.s32 0, %v67
    %v73 = vsel %vm71, %v72, %v67
    %v74 = vshrl.u32 %v73, 4
    %v75 = vand.u32 %v73, 15
    %v76 = vsub.s32 0, %v75
    %v77 = vsel %vm71, %v76, %v75
    %vm78 = vcmp.lt.s32.totalorder %v68, 0
    %v79 = vsub.s32 0, %v68
    %v80 = vsel %vm78, %v79, %v68
    %v81 = vshrl.u32 %v80, 4
    %v82 = vand.u32 %v80, 15
    %v83 = vsub.s32 0, %v82
    %v84 = vsel %vm78, %v83, %v82
    %vm85 = vcmp.lt.s32.totalorder %v69, 0
    %v86 = vsub.s32 0, %v69
    %v87 = vsel %vm85, %v86, %v69
    %v88 = vshrl.u32 %v87, 4
    %v89 = vand.u32 %v87, 15
    %v90 = vsub.s32 0, %v89
    %v91 = vsel %vm85, %v90, %v89
    %vm92 = vcmp.lt.s32.totalorder %v70, 0
    %v93 = vsub.s32 0, %v70
    %v94 = vsel %vm92, %v93, %v70
    %v95 = vshrl.u32 %v94, 4
    %v96 = vand.u32 %v94, 15
    %v97 = vsub.s32 0, %v96
    %v98 = vsel %vm92, %v97, %v96
    %vm99 = vcmp.ne.s32.totalorder %v77, 0
    %vm100 = vcmp.ne.s32.totalorder %v84, 0
    %vm101 = vcmp.ne.s32.totalorder %v91, 0
    %vm102 = vcmp.ne.s32.totalorder %v98, 0
    %vm103 = vcmp.lt.s32.totalorder %v77, 0
    %vm104 = vcmp.lt.s32.totalorder %v84, 0
    %vm105 = vcmp.lt.s32.totalorder %v91, 0
    %vm106 = vcmp.lt.s32.totalorder %v98, 0
    %vm107 = vmand %vm103, %vm99
    %vm108 = vmand %vm104, %vm100
    %vm109 = vmand %vm105, %vm101
    %vm110 = vmand %vm106, %vm102
    %v111 = vadd.s32 %v77, 16
    %v112 = vadd.s32 %v84, 16
    %v113 = vadd.s32 %v91, 16
    %v114 = vadd.s32 %v98, 16
    %v115 = vsel %vm107, %v111, %v77
    %v116 = vsel %vm108, %v112, %v84
    %v117 = vsel %vm109, %v113, %v91
    %v118 = vsel %vm110, %v114, %v98
    %vm119 = vcmp.ge.s32.totalorder %v115, 1
    %vm120 = vcmp.ge.s32.totalorder %v116, 1
    %vm121 = vcmp.ge.s32.totalorder %v117, 1
    %vm122 = vcmp.ge.s32.totalorder %v118, 1
    %vm123 = vcmp.le.s32.totalorder %v115, 14
    %vm124 = vcmp.le.s32.totalorder %v116, 14
    %vm125 = vcmp.le.s32.totalorder %v117, 14
    %vm126 = vcmp.le.s32.totalorder %v118, 14
    %v127 = vrot.slane %v62, 7
    %v128 = vrot.slane %v63, 7
    %v129 = vrot.slane %v64, 7
    %v130 = vrot.slane %v65, 7
    %vm131 = vcmp.lt.s32.totalorder %v67, 1
    %v132 = vsel %vm131, %v129, %v130
    %v133 = vsel %vm131, %v128, %v129
    %v134 = vsel %vm131, %v127, %v128
    %v135 = vsel %vm131, %v130, %v127
    %v136 = vsel %vm119, 1, 0
    %v137 = vsel %vm120, 1, 0
    %v138 = vsel %vm121, 1, 0
    %v139 = vsel %vm122, 1, 0
    %vm140 = vcmp.eq.s32.totalorder %v136, 1
    %vm141 = vcmp.eq.s32.totalorder %v137, 1
    %vm142 = vcmp.eq.s32.totalorder %v138, 1
    %vm143 = vcmp.eq.s32.totalorder %v139, 1
    %v144 = vsel %vm140, %v135, 0.0
    %v145 = vsel %vm141, %v134, 0.0
    %v146 = vsel %vm142, %v133, 0.0
    %v147 = vsel %vm143, %v132, 0.0
    %v148 = vrot.slane %v62, 1
    %v149 = vrot.slane %v63, 1
    %v150 = vrot.slane %v64, 1
    %v151 = vrot.slane %v65, 1
    %vm152 = vcmp.lt.s32.totalorder %v67, 7
    %v153 = vsel %vm152, %v150, %v151
    %v154 = vsel %vm152, %v149, %v150
    %v155 = vsel %vm152, %v148, %v149
    %v156 = vsel %vm152, %v151, %v148
    %v157 = vsel %vm123, 1, 0
    %v158 = vsel %vm124, 1, 0
    %v159 = vsel %vm125, 1, 0
    %v160 = vsel %vm126, 1, 0
    %vm161 = vcmp.eq.s32.totalorder %v157, 1
    %vm162 = vcmp.eq.s32.totalorder %v158, 1
    %vm163 = vcmp.eq.s32.totalorder %v159, 1
    %vm164 = vcmp.eq.s32.totalorder %v160, 1
    %v165 = vsel %vm161, %v155, 0.0
    %v166 = vsel %vm162, %v154, 0.0
    %v167 = vsel %vm163, %v153, 0.0
    %v168 = vsel %vm164, %v156, 0.0
    %v169 = vld [vmem:[%s2] sm:$0x1]
    %v171 = vlaneseq
    %v172 = vshrl.u32 %v171, 7
    %v173 = vsub.s32 0, %v172
    %v174 = vrot.slane %v169, %v173
    %v176 = vld [vmem:[#allocation5] sm:$0xff]
    %v177 = vld [vmem:[#allocation5 + $0x8] sm:$0xff]
    %v178 = vld [vmem:[#allocation5 + $0x10] sm:$0xff]
    %v179 = vld [vmem:[#allocation5 + $0x18] sm:$0xff]
    %v180 = vld [vmem:[#allocation5 + $0x20] sm:$0xff]
    %v181 = vld [vmem:[#allocation5 + $0x28] sm:$0xff]
    %v182 = vld [vmem:[#allocation5 + $0x30] sm:$0xff]
    %v183 = vld [vmem:[#allocation5 + $0x38] sm:$0xff]
    %v184 = vld [vmem:[#allocation5 + $0x40] sm:$0xff]
    %v185 = vld [vmem:[#allocation5 + $0x48] sm:$0xff]
    %v186 = vld [vmem:[#allocation5 + $0x50] sm:$0xff]
    %v187 = vld [vmem:[#allocation5 + $0x58] sm:$0xff]
    %v188 = vld [vmem:[#allocation5 + $0x60] sm:$0xff]
    %v189 = vld [vmem:[#allocation5 + $0x68] sm:$0xff]
    %v190 = vld [vmem:[#allocation5 + $0x70] sm:$0xff]
    %v191 = vld [vmem:[#allocation5 + $0x78] sm:$0xff]
    %192 = vmatprep.subr.mxu0 0.0
    %193 = vmatpush1.msra.mxu0 %v191
    %194 = vmatprep.subr.mxu0 0.0
    %195 = vmatpush1.msra.mxu0 %v190
    %196 = vmatprep.subr.mxu0 0.0
    %197 = vmatpush1.msra.mxu0 %v189
    %198 = vmatprep.subr.mxu0 0.0
    %199 = vmatpush1.msra.mxu0 %v188
    %200 = vmatprep.subr.mxu0 0.0
    %201 = vmatpush1.msra.mxu0 %v187
    %202 = vmatprep.subr.mxu0 0.0
    %203 = vmatpush1.msra.mxu0 %v186
    %204 = vmatprep.subr.mxu0 0.0
    %205 = vmatpush1.msra.mxu0 %v185
    %206 = vmatprep.subr.mxu0 0.0
    %207 = vmatpush1.msra.mxu0 %v184
    %208 = vmatprep.subr.mxu0 0.0
    %209 = vmatpush1.msra.mxu0 %v183
    %210 = vmatprep.subr.mxu0 0.0
    %211 = vmatpush1.msra.mxu0 %v182
    %212 = vmatprep.subr.mxu0 0.0
    %213 = vmatpush1.msra.mxu0 %v181
    %214 = vmatprep.subr.mxu0 0.0
    %215 = vmatpush1.msra.mxu0 %v180
    %216 = vmatprep.subr.mxu0 0.0
    %217 = vmatpush1.msra.mxu0 %v179
    %218 = vmatprep.subr.mxu0 0.0
    %219 = vmatpush1.msra.mxu0 %v178
    %220 = vmatprep.subr.mxu0 0.0
    %221 = vmatpush1.msra.mxu0 %v177
    %222 = vmatprep.subr.mxu0 0.0
    %223 = vmatpush1.msra.mxu0 %v176
    %224 = vmatprep.subr.mxu0 0.0
    %225 = vmatpush2.msra.mxu0 0.0
    %226 = vmatprep.subr.mxu0 0.0
    %227 = vmatpush2.msra.mxu0 0.0
    %228 = vmatprep.subr.mxu0 0.0
    %229 = vmatpush2.msra.mxu0 0.0
    %230 = vmatprep.subr.mxu0 0.0
    %231 = vmatpush2.msra.mxu0 0.0
    %232 = vmatprep.subr.mxu0 0.0
    %233 = vmatpush2.msra.mxu0 0.0
    %234 = vmatprep.subr.mxu0 0.0
    %235 = vmatpush2.msra.mxu0 0.0
    %236 = vmatprep.subr.mxu0 0.0
    %237 = vmatpush2.msra.mxu0 0.0
    %238 = vmatprep.subr.mxu0 0.0
    %239 = vmatpush2.msra.mxu0 0.0
    %240 = vmatprep.subr.mxu0 0.0
    %241 = vmatpush2.msra.mxu0 0.0
    %242 = vmatprep.subr.mxu0 0.0
    %243 = vmatpush2.msra.mxu0 0.0
    %244 = vmatprep.subr.mxu0 0.0
    %245 = vmatpush2.msra.mxu0 0.0
    %246 = vmatprep.subr.mxu0 0.0
    %247 = vmatpush2.msra.mxu0 0.0
    %248 = vmatprep.subr.mxu0 0.0
    %249 = vmatpush2.msra.mxu0 0.0
    %250 = vmatprep.subr.mxu0 0.0
    %251 = vmatpush2.msra.mxu0 0.0
    %252 = vmatprep.subr.mxu0 0.0
    %253 = vmatpush2.msra.mxu0 0.0
    %254 = vmatprep.subr.mxu0 0.0
    %255 = vmatpush2.msra.mxu0 0.0
    %256 = vmatprep.mubr.f32.mxu0 0.0
    %257 = vmatmul.mubr.f32.gmra.mxu0 %v144
    %v258 = vpop.f32.mrf.mxu0
    %v259 = vadd.f32 0.0, %v258
    %v260 = vpop.f32.mrf.mxu0
    %261 = vmatprep.mubr.f32.mxu0 0.0
    %262 = vmatmul.mubr.f32.gmra.mxu0 %v145
    %v263 = vpop.f32.mrf.mxu0
    %v264 = vadd.f32 0.0, %v263
    %v265 = vpop.f32.mrf.mxu0
    %266 = vmatprep.mubr.f32.mxu0 0.0
    %267 = vmatmul.mubr.f32.gmra.mxu0 %v146
    %v268 = vpop.f32.mrf.mxu0
    %v269 = vadd.f32 0.0, %v268
    %v270 = vpop.f32.mrf.mxu0
    %271 = vmatprep.mubr.f32.mxu0 0.0
    %272 = vmatmul.mubr.f32.gmra.mxu0 %v147
    %v273 = vpop.f32.mrf.mxu0
    %v274 = vadd.f32 0.0, %v273
    %v275 = vpop.f32.mrf.mxu0
    %276 = vdwg.mxu0
    %v277 = vadd.f32 %v174, %v259
    %v278 = vadd.f32 %v174, %v264
    %v279 = vadd.f32 %v174, %v269
    %v280 = vadd.f32 %v174, %v274
    %s281 = scalar_lea.vmem [#allocation5], 128
    %v282 = vld [vmem:[%s281] sm:$0xff]
    %v283 = vld [vmem:[%s281 + $0x8] sm:$0xff]
    %v284 = vld [vmem:[%s281 + $0x10] sm:$0xff]
    %v285 = vld [vmem:[%s281 + $0x18] sm:$0xff]
    %v286 = vld [vmem:[%s281 + $0x20] sm:$0xff]
    %v287 = vld [vmem:[%s281 + $0x28] sm:$0xff]
    %v288 = vld [vmem:[%s281 + $0x30] sm:$0xff]
    %v289 = vld [vmem:[%s281 + $0x38] sm:$0xff]
    %v290 = vld [vmem:[%s281 + $0x40] sm:$0xff]
    %v291 = vld [vmem:[%s281 + $0x48] sm:$0xff]
    %v292 = vld [vmem:[%s281 + $0x50] sm:$0xff]
    %v293 = vld [vmem:[%s281 + $0x58] sm:$0xff]
    %v294 = vld [vmem:[%s281 + $0x60] sm:$0xff]
    %v295 = vld [vmem:[%s281 + $0x68] sm:$0xff]
    %v296 = vld [vmem:[%s281 + $0x70] sm:$0xff]
    %v297 = vld [vmem:[%s281 + $0x78] sm:$0xff]
    %298 = vmatprep.subr.mxu0 0.0
    %299 = vmatpush1.msra.mxu0 %v297
    %300 = vmatprep.subr.mxu0 0.0
    %301 = vmatpush1.msra.mxu0 %v296
    %302 = vmatprep.subr.mxu0 0.0
    %303 = vmatpush1.msra.mxu0 %v295
    %304 = vmatprep.subr.mxu0 0.0
    %305 = vmatpush1.msra.mxu0 %v294
    %306 = vmatprep.subr.mxu0 0.0
    %307 = vmatpush1.msra.mxu0 %v293
    %308 = vmatprep.subr.mxu0 0.0
    %309 = vmatpush1.msra.mxu0 %v292
    %310 = vmatprep.subr.mxu0 0.0
    %311 = vmatpush1.msra.mxu0 %v291
    %312 = vmatprep.subr.mxu0 0.0
    %313 = vmatpush1.msra.mxu0 %v290
    %314 = vmatprep.subr.mxu0 0.0
    %315 = vmatpush1.msra.mxu0 %v289
    %316 = vmatprep.subr.mxu0 0.0
    %317 = vmatpush1.msra.mxu0 %v288
    %318 = vmatprep.subr.mxu0 0.0
    %319 = vmatpush1.msra.mxu0 %v287
    %320 = vmatprep.subr.mxu0 0.0
    %321 = vmatpush1.msra.mxu0 %v286
    %322 = vmatprep.subr.mxu0 0.0
    %323 = vmatpush1.msra.mxu0 %v285
    %324 = vmatprep.subr.mxu0 0.0
    %325 = vmatpush1.msra.mxu0 %v284
    %326 = vmatprep.subr.mxu0 0.0
    %327 = vmatpush1.msra.mxu0 %v283
    %328 = vmatprep.subr.mxu0 0.0
    %329 = vmatpush1.msra.mxu0 %v282
    %330 = vmatprep.subr.mxu0 0.0
    %331 = vmatpush2.msra.mxu0 0.0
    %332 = vmatprep.subr.mxu0 0.0
    %333 = vmatpush2.msra.mxu0 0.0
    %334 = vmatprep.subr.mxu0 0.0
    %335 = vmatpush2.msra.mxu0 0.0
    %336 = vmatprep.subr.mxu0 0.0
    %337 = vmatpush2.msra.mxu0 0.0
    %338 = vmatprep.subr.mxu0 0.0
    %339 = vmatpush2.msra.mxu0 0.0
    %340 = vmatprep.subr.mxu0 0.0
    %341 = vmatpush2.msra.mxu0 0.0
    %342 = vmatprep.subr.mxu0 0.0
    %343 = vmatpush2.msra.mxu0 0.0
    %344 = vmatprep.subr.mxu0 0.0
    %345 = vmatpush2.msra.mxu0 0.0
    %346 = vmatprep.subr.mxu0 0.0
    %347 = vmatpush2.msra.mxu0 0.0
    %348 = vmatprep.subr.mxu0 0.0
    %349 = vmatpush2.msra.mxu0 0.0
    %350 = vmatprep.subr.mxu0 0.0
    %351 = vmatpush2.msra.mxu0 0.0
    %352 = vmatprep.subr.mxu0 0.0
    %353 = vmatpush2.msra.mxu0 0.0
    %354 = vmatprep.subr.mxu0 0.0
    %355 = vmatpush2.msra.mxu0 0.0
    %356 = vmatprep.subr.mxu0 0.0
    %357 = vmatpush2.msra.mxu0 0.0
    %358 = vmatprep.subr.mxu0 0.0
    %359 = vmatpush2.msra.mxu0 0.0
    %360 = vmatprep.subr.mxu0 0.0
    %361 = vmatpush2.msra.mxu0 0.0
    %362 = vmatprep.mubr.f32.mxu0 0.0
    %363 = vmatmul.mubr.f32.gmra.mxu0 %v62
    %v364 = vpop.f32.mrf.mxu0
    %v365 = vadd.f32 0.0, %v364
    %v366 = vpop.f32.mrf.mxu0
    %367 = vmatprep.mubr.f32.mxu0 0.0
    %368 = vmatmul.mubr.f32.gmra.mxu0 %v63
    %v369 = vpop.f32.mrf.mxu0
    %v370 = vadd.f32 0.0, %v369
    %v371 = vpop.f32.mrf.mxu0
    %372 = vmatprep.mubr.f32.mxu0 0.0
    %373 = vmatmul.mubr.f32.gmra.mxu0 %v64
    %v374 = vpop.f32.mrf.mxu0
    %v375 = vadd.f32 0.0, %v374
    %v376 = vpop.f32.mrf.mxu0
    %377 = vmatprep.mubr.f32.mxu0 0.0
    %378 = vmatmul.mubr.f32.gmra.mxu0 %v65
    %v379 = vpop.f32.mrf.mxu0
    %v380 = vadd.f32 0.0, %v379
    %v381 = vpop.f32.mrf.mxu0
    %382 = vdwg.mxu0
    %v383 = vadd.f32 %v277, %v365
    %v384 = vadd.f32 %v278, %v370
    %v385 = vadd.f32 %v279, %v375
    %v386 = vadd.f32 %v280, %v380
    %s387 = scalar_lea.vmem [#allocation5], 256
    %v388 = vld [vmem:[%s387] sm:$0xff]
    %v389 = vld [vmem:[%s387 + $0x8] sm:$0xff]
    %v390 = vld [vmem:[%s387 + $0x10] sm:$0xff]
    %v391 = vld [vmem:[%s387 + $0x18] sm:$0xff]
    %v392 = vld [vmem:[%s387 + $0x20] sm:$0xff]
    %v393 = vld [vmem:[%s387 + $0x28] sm:$0xff]
    %v394 = vld [vmem:[%s387 + $0x30] sm:$0xff]
    %v395 = vld [vmem:[%s387 + $0x38] sm:$0xff]
    %v396 = vld [vmem:[%s387 + $0x40] sm:$0xff]
    %v397 = vld [vmem:[%s387 + $0x48] sm:$0xff]
    %v398 = vld [vmem:[%s387 + $0x50] sm:$0xff]
    %v399 = vld [vmem:[%s387 + $0x58] sm:$0xff]
    %v400 = vld [vmem:[%s387 + $0x60] sm:$0xff]
    %v401 = vld [vmem:[%s387 + $0x68] sm:$0xff]
    %v402 = vld [vmem:[%s387 + $0x70] sm:$0xff]
    %v403 = vld [vmem:[%s387 + $0x78] sm:$0xff]
    %404 = vmatprep.subr.mxu0 0.0
    %405 = vmatpush1.msra.mxu0 %v403
    %406 = vmatprep.subr.mxu0 0.0
    %407 = vmatpush1.msra.mxu0 %v402
    %408 = vmatprep.subr.mxu0 0.0
    %409 = vmatpush1.msra.mxu0 %v401
    %410 = vmatprep.subr.mxu0 0.0
    %411 = vmatpush1.msra.mxu0 %v400
    %412 = vmatprep.subr.mxu0 0.0
    %413 = vmatpush1.msra.mxu0 %v399
    %414 = vmatprep.subr.mxu0 0.0
    %415 = vmatpush1.msra.mxu0 %v398
    %416 = vmatprep.subr.mxu0 0.0
    %417 = vmatpush1.msra.mxu0 %v397
    %418 = vmatprep.subr.mxu0 0.0
    %419 = vmatpush1.msra.mxu0 %v396
    %420 = vmatprep.subr.mxu0 0.0
    %421 = vmatpush1.msra.mxu0 %v395
    %422 = vmatprep.subr.mxu0 0.0
    %423 = vmatpush1.msra.mxu0 %v394
    %424 = vmatprep.subr.mxu0 0.0
    %425 = vmatpush1.msra.mxu0 %v393
    %426 = vmatprep.subr.mxu0 0.0
    %427 = vmatpush1.msra.mxu0 %v392
    %428 = vmatprep.subr.mxu0 0.0
    %429 = vmatpush1.msra.mxu0 %v391
    %430 = vmatprep.subr.mxu0 0.0
    %431 = vmatpush1.msra.mxu0 %v390
    %432 = vmatprep.subr.mxu0 0.0
    %433 = vmatpush1.msra.mxu0 %v389
    %434 = vmatprep.subr.mxu0 0.0
    %435 = vmatpush1.msra.mxu0 %v388
    %436 = vmatprep.subr.mxu0 0.0
    %437 = vmatpush2.msra.mxu0 0.0
    %438 = vmatprep.subr.mxu0 0.0
    %439 = vmatpush2.msra.mxu0 0.0
    %440 = vmatprep.subr.mxu0 0.0
    %441 = vmatpush2.msra.mxu0 0.0
    %442 = vmatprep.subr.mxu0 0.0
    %443 = vmatpush2.msra.mxu0 0.0
    %444 = vmatprep.subr.mxu0 0.0
    %445 = vmatpush2.msra.mxu0 0.0
    %446 = vmatprep.subr.mxu0 0.0
    %447 = vmatpush2.msra.mxu0 0.0
    %448 = vmatprep.subr.mxu0 0.0
    %449 = vmatpush2.msra.mxu0 0.0
    %450 = vmatprep.subr.mxu0 0.0
    %451 = vmatpush2.msra.mxu0 0.0
    %452 = vmatprep.subr.mxu0 0.0
    %453 = vmatpush2.msra.mxu0 0.0
    %454 = vmatprep.subr.mxu0 0.0
    %455 = vmatpush2.msra.mxu0 0.0
    %456 = vmatprep.subr.mxu0 0.0
    %457 = vmatpush2.msra.mxu0 0.0
    %458 = vmatprep.subr.mxu0 0.0
    %459 = vmatpush2.msra.mxu0 0.0
    %460 = vmatprep.subr.mxu0 0.0
    %461 = vmatpush2.msra.mxu0 0.0
    %462 = vmatprep.subr.mxu0 0.0
    %463 = vmatpush2.msra.mxu0 0.0
    %464 = vmatprep.subr.mxu0 0.0
    %465 = vmatpush2.msra.mxu0 0.0
    %466 = vmatprep.subr.mxu0 0.0
    %467 = vmatpush2.msra.mxu0 0.0
    %468 = vmatprep.mubr.f32.mxu0 0.0
    %469 = vmatmul.mubr.f32.gmra.mxu0 %v165
    %v470 = vpop.f32.mrf.mxu0
    %v471 = vadd.f32 0.0, %v470
    %v472 = vpop.f32.mrf.mxu0
    %473 = vmatprep.mubr.f32.mxu0 0.0
    %474 = vmatmul.mubr.f32.gmra.mxu0 %v166
    %v475 = vpop.f32.mrf.mxu0
    %v476 = vadd.f32 0.0, %v475
    %v477 = vpop.f32.mrf.mxu0
    %478 = vmatprep.mubr.f32.mxu0 0.0
    %479 = vmatmul.mubr.f32.gmra.mxu0 %v167
    %v480 = vpop.f32.mrf.mxu0
    %v481 = vadd.f32 0.0, %v480
    %v482 = vpop.f32.mrf.mxu0
    %483 = vmatprep.mubr.f32.mxu0 0.0
    %484 = vmatmul.mubr.f32.gmra.mxu0 %v168
    %v485 = vpop.f32.mrf.mxu0
    %v486 = vadd.f32 0.0, %v485
    %v487 = vpop.f32.mrf.mxu0
    %488 = vdwg.mxu0
    %v489 = vadd.f32 %v383, %v471
    %v490 = vadd.f32 %v384, %v476
    %v491 = vadd.f32 %v385, %v481
    %v492 = vadd.f32 %v386, %v486
    %v493 = vmax.f32 %v489, 0.0
    %v494 = vmax.f32 %v490, 0.0
    %v495 = vmax.f32 %v491, 0.0
    %v496 = vmax.f32 %v492, 0.0
    %v497 = vrot.slane %v493, 7
    %v498 = vrot.slane %v494, 7
    %v499 = vrot.slane %v495, 7
    %v500 = vrot.slane %v496, 7
    %v501 = vsel %vm131, %v499, %v500
    %v502 = vsel %vm131, %v498, %v499
    %v503 = vsel %vm131, %v497, %v498
    %v504 = vsel %vm131, %v500, %v497
    %v505 = vsel %vm140, %v504, 0.0
    %v506 = vsel %vm141, %v503, 0.0
    %v507 = vsel %vm142, %v502, 0.0
    %v508 = vsel %vm143, %v501, 0.0
    %v509 = vrot.slane %v493, 1
    %v510 = vrot.slane %v494, 1
    %v511 = vrot.slane %v495, 1
    %v512 = vrot.slane %v496, 1
    %v513 = vsel %vm152, %v511, %v512
    %v514 = vsel %vm152, %v510, %v511
    %v515 = vsel %vm152, %v509, %v510
    %v516 = vsel %vm152, %v512, %v509
    %v517 = vsel %vm161, %v515, 0.0
    %v518 = vsel %vm162, %v514, 0.0
    %v519 = vsel %vm163, %v513, 0.0
    %v520 = vsel %vm164, %v516, 0.0
    %v521 = vld [vmem:[%s4] sm:$0x1]
    %v523 = vlaneseq
    %v524 = vshrl.u32 %v523, 7
    %v525 = vsub.s32 0, %v524
    %v526 = vrot.slane %v521, %v525
    %v528 = vld [vmem:[#allocation7] sm:$0xff]
    %v529 = vld [vmem:[#allocation7 + $0x8] sm:$0xff]
    %v530 = vld [vmem:[#allocation7 + $0x10] sm:$0xff]
    %v531 = vld [vmem:[#allocation7 + $0x18] sm:$0xff]
    %v532 = vld [vmem:[#allocation7 + $0x20] sm:$0xff]
    %v533 = vld [vmem:[#allocation7 + $0x28] sm:$0xff]
    %v534 = vld [vmem:[#allocation7 + $0x30] sm:$0xff]
    %v535 = vld [vmem:[#allocation7 + $0x38] sm:$0xff]
    %v536 = vld [vmem:[#allocation7 + $0x40] sm:$0xff]
    %v537 = vld [vmem:[#allocation7 + $0x48] sm:$0xff]
    %v538 = vld [vmem:[#allocation7 + $0x50] sm:$0xff]
    %v539 = vld [vmem:[#allocation7 + $0x58] sm:$0xff]
    %v540 = vld [vmem:[#allocation7 + $0x60] sm:$0xff]
    %v541 = vld [vmem:[#allocation7 + $0x68] sm:$0xff]
    %v542 = vld [vmem:[#allocation7 + $0x70] sm:$0xff]
    %v543 = vld [vmem:[#allocation7 + $0x78] sm:$0xff]
    %544 = vmatprep.subr.mxu0 0.0
    %545 = vmatpush1.msra.mxu0 %v543
    %546 = vmatprep.subr.mxu0 0.0
    %547 = vmatpush1.msra.mxu0 %v542
    %548 = vmatprep.subr.mxu0 0.0
    %549 = vmatpush1.msra.mxu0 %v541
    %550 = vmatprep.subr.mxu0 0.0
    %551 = vmatpush1.msra.mxu0 %v540
    %552 = vmatprep.subr.mxu0 0.0
    %553 = vmatpush1.msra.mxu0 %v539
    %554 = vmatprep.subr.mxu0 0.0
    %555 = vmatpush1.msra.mxu0 %v538
    %556 = vmatprep.subr.mxu0 0.0
    %557 = vmatpush1.msra.mxu0 %v537
    %558 = vmatprep.subr.mxu0 0.0
    %559 = vmatpush1.msra.mxu0 %v536
    %560 = vmatprep.subr.mxu0 0.0
    %561 = vmatpush1.msra.mxu0 %v535
    %562 = vmatprep.subr.mxu0 0.0
    %563 = vmatpush1.msra.mxu0 %v534
    %564 = vmatprep.subr.mxu0 0.0
    %565 = vmatpush1.msra.mxu0 %v533
    %566 = vmatprep.subr.mxu0 0.0
    %567 = vmatpush1.msra.mxu0 %v532
    %568 = vmatprep.subr.mxu0 0.0
    %569 = vmatpush1.msra.mxu0 %v531
    %570 = vmatprep.subr.mxu0 0.0
    %571 = vmatpush1.msra.mxu0 %v530
    %572 = vmatprep.subr.mxu0 0.0
    %573 = vmatpush1.msra.mxu0 %v529
    %574 = vmatprep.subr.mxu0 0.0
    %575 = vmatpush1.msra.mxu0 %v528
    %576 = vmatprep.subr.mxu0 0.0
    %577 = vmatpush2.msra.mxu0 0.0
    %578 = vmatprep.subr.mxu0 0.0
    %579 = vmatpush2.msra.mxu0 0.0
    %580 = vmatprep.subr.mxu0 0.0
    %581 = vmatpush2.msra.mxu0 0.0
    %582 = vmatprep.subr.mxu0 0.0
    %583 = vmatpush2.msra.mxu0 0.0
    %584 = vmatprep.subr.mxu0 0.0
    %585 = vmatpush2.msra.mxu0 0.0
    %586 = vmatprep.subr.mxu0 0.0
    %587 = vmatpush2.msra.mxu0 0.0
    %588 = vmatprep.subr.mxu0 0.0
    %589 = vmatpush2.msra.mxu0 0.0
    %590 = vmatprep.subr.mxu0 0.0
    %591 = vmatpush2.msra.mxu0 0.0
    %592 = vmatprep.subr.mxu0 0.0
    %593 = vmatpush2.msra.mxu0 0.0
    %594 = vmatprep.subr.mxu0 0.0
    %595 = vmatpush2.msra.mxu0 0.0
    %596 = vmatprep.subr.mxu0 0.0
    %597 = vmatpush2.msra.mxu0 0.0
    %598 = vmatprep.subr.mxu0 0.0
    %599 = vmatpush2.msra.mxu0 0.0
    %600 = vmatprep.subr.mxu0 0.0
    %601 = vmatpush2.msra.mxu0 0.0
    %602 = vmatprep.subr.mxu0 0.0
    %603 = vmatpush2.msra.mxu0 0.0
    %604 = vmatprep.subr.mxu0 0.0
    %605 = vmatpush2.msra.mxu0 0.0
    %606 = vmatprep.subr.mxu0 0.0
    %607 = vmatpush2.msra.mxu0 0.0
    %608 = vmatprep.mubr.f32.mxu0 0.0
    %609 = vmatmul.mubr.f32.gmra.mxu0 %v505
    %v610 = vpop.f32.mrf.mxu0
    %v611 = vadd.f32 0.0, %v610
    %v612 = vpop.f32.mrf.mxu0
    %613 = vmatprep.mubr.f32.mxu0 0.0
    %614 = vmatmul.mubr.f32.gmra.mxu0 %v506
    %v615 = vpop.f32.mrf.mxu0
    %v616 = vadd.f32 0.0, %v615
    %v617 = vpop.f32.mrf.mxu0
    %618 = vmatprep.mubr.f32.mxu0 0.0
    %619 = vmatmul.mubr.f32.gmra.mxu0 %v507
    %v620 = vpop.f32.mrf.mxu0
    %v621 = vadd.f32 0.0, %v620
    %v622 = vpop.f32.mrf.mxu0
    %623 = vmatprep.mubr.f32.mxu0 0.0
    %624 = vmatmul.mubr.f32.gmra.mxu0 %v508
    %v625 = vpop.f32.mrf.mxu0
    %v626 = vadd.f32 0.0, %v625
    %v627 = vpop.f32.mrf.mxu0
    %628 = vdwg.mxu0
    %v629 = vadd.f32 %v526, %v611
    %v630 = vadd.f32 %v526, %v616
    %v631 = vadd.f32 %v526, %v621
    %v632 = vadd.f32 %v526, %v626
    %s633 = scalar_lea.vmem [#allocation7], 128
    %v634 = vld [vmem:[%s633] sm:$0xff]
    %v635 = vld [vmem:[%s633 + $0x8] sm:$0xff]
    %v636 = vld [vmem:[%s633 + $0x10] sm:$0xff]
    %v637 = vld [vmem:[%s633 + $0x18] sm:$0xff]
    %v638 = vld [vmem:[%s633 + $0x20] sm:$0xff]
    %v639 = vld [vmem:[%s633 + $0x28] sm:$0xff]
    %v640 = vld [vmem:[%s633 + $0x30] sm:$0xff]
    %v641 = vld [vmem:[%s633 + $0x38] sm:$0xff]
    %v642 = vld [vmem:[%s633 + $0x40] sm:$0xff]
    %v643 = vld [vmem:[%s633 + $0x48] sm:$0xff]
    %v644 = vld [vmem:[%s633 + $0x50] sm:$0xff]
    %v645 = vld [vmem:[%s633 + $0x58] sm:$0xff]
    %v646 = vld [vmem:[%s633 + $0x60] sm:$0xff]
    %v647 = vld [vmem:[%s633 + $0x68] sm:$0xff]
    %v648 = vld [vmem:[%s633 + $0x70] sm:$0xff]
    %v649 = vld [vmem:[%s633 + $0x78] sm:$0xff]
    %650 = vmatprep.subr.mxu0 0.0
    %651 = vmatpush1.msra.mxu0 %v649
    %652 = vmatprep.subr.mxu0 0.0
    %653 = vmatpush1.msra.mxu0 %v648
    %654 = vmatprep.subr.mxu0 0.0
    %655 = vmatpush1.msra.mxu0 %v647
    %656 = vmatprep.subr.mxu0 0.0
    %657 = vmatpush1.msra.mxu0 %v646
    %658 = vmatprep.subr.mxu0 0.0
    %659 = vmatpush1.msra.mxu0 %v645
    %660 = vmatprep.subr.mxu0 0.0
    %661 = vmatpush1.msra.mxu0 %v644
    %662 = vmatprep.subr.mxu0 0.0
    %663 = vmatpush1.msra.mxu0 %v643
    %664 = vmatprep.subr.mxu0 0.0
    %665 = vmatpush1.msra.mxu0 %v642
    %666 = vmatprep.subr.mxu0 0.0
    %667 = vmatpush1.msra.mxu0 %v641
    %668 = vmatprep.subr.mxu0 0.0
    %669 = vmatpush1.msra.mxu0 %v640
    %670 = vmatprep.subr.mxu0 0.0
    %671 = vmatpush1.msra.mxu0 %v639
    %672 = vmatprep.subr.mxu0 0.0
    %673 = vmatpush1.msra.mxu0 %v638
    %674 = vmatprep.subr.mxu0 0.0
    %675 = vmatpush1.msra.mxu0 %v637
    %676 = vmatprep.subr.mxu0 0.0
    %677 = vmatpush1.msra.mxu0 %v636
    %678 = vmatprep.subr.mxu0 0.0
    %679 = vmatpush1.msra.mxu0 %v635
    %680 = vmatprep.subr.mxu0 0.0
    %681 = vmatpush1.msra.mxu0 %v634
    %682 = vmatprep.subr.mxu0 0.0
    %683 = vmatpush2.msra.mxu0 0.0
    %684 = vmatprep.subr.mxu0 0.0
    %685 = vmatpush2.msra.mxu0 0.0
    %686 = vmatprep.subr.mxu0 0.0
    %687 = vmatpush2.msra.mxu0 0.0
    %688 = vmatprep.subr.mxu0 0.0
    %689 = vmatpush2.msra.mxu0 0.0
    %690 = vmatprep.subr.mxu0 0.0
    %691 = vmatpush2.msra.mxu0 0.0
    %692 = vmatprep.subr.mxu0 0.0
    %693 = vmatpush2.msra.mxu0 0.0
    %694 = vmatprep.subr.mxu0 0.0
    %695 = vmatpush2.msra.mxu0 0.0
    %696 = vmatprep.subr.mxu0 0.0
    %697 = vmatpush2.msra.mxu0 0.0
    %698 = vmatprep.subr.mxu0 0.0
    %699 = vmatpush2.msra.mxu0 0.0
    %700 = vmatprep.subr.mxu0 0.0
    %701 = vmatpush2.msra.mxu0 0.0
    %702 = vmatprep.subr.mxu0 0.0
    %703 = vmatpush2.msra.mxu0 0.0
    %704 = vmatprep.subr.mxu0 0.0
    %705 = vmatpush2.msra.mxu0 0.0
    %706 = vmatprep.subr.mxu0 0.0
    %707 = vmatpush2.msra.mxu0 0.0
    %708 = vmatprep.subr.mxu0 0.0
    %709 = vmatpush2.msra.mxu0 0.0
    %710 = vmatprep.subr.mxu0 0.0
    %711 = vmatpush2.msra.mxu0 0.0
    %712 = vmatprep.subr.mxu0 0.0
    %713 = vmatpush2.msra.mxu0 0.0
    %714 = vmatprep.mubr.f32.mxu0 0.0
    %715 = vmatmul.mubr.f32.gmra.mxu0 %v493
    %v716 = vpop.f32.mrf.mxu0
    %v717 = vadd.f32 0.0, %v716
    %v718 = vpop.f32.mrf.mxu0
    %719 = vmatprep.mubr.f32.mxu0 0.0
    %720 = vmatmul.mubr.f32.gmra.mxu0 %v494
    %v721 = vpop.f32.mrf.mxu0
    %v722 = vadd.f32 0.0, %v721
    %v723 = vpop.f32.mrf.mxu0
    %724 = vmatprep.mubr.f32.mxu0 0.0
    %725 = vmatmul.mubr.f32.gmra.mxu0 %v495
    %v726 = vpop.f32.mrf.mxu0
    %v727 = vadd.f32 0.0, %v726
    %v728 = vpop.f32.mrf.mxu0
    %729 = vmatprep.mubr.f32.mxu0 0.0
    %730 = vmatmul.mubr.f32.gmra.mxu0 %v496
    %v731 = vpop.f32.mrf.mxu0
    %v732 = vadd.f32 0.0, %v731
    %v733 = vpop.f32.mrf.mxu0
    %734 = vdwg.mxu0
    %v735 = vadd.f32 %v629, %v717
    %v736 = vadd.f32 %v630, %v722
    %v737 = vadd.f32 %v631, %v727
    %v738 = vadd.f32 %v632, %v732
    %s739 = scalar_lea.vmem [#allocation7], 256
    %v740 = vld [vmem:[%s739] sm:$0xff]
    %v741 = vld [vmem:[%s739 + $0x8] sm:$0xff]
    %v742 = vld [vmem:[%s739 + $0x10] sm:$0xff]
    %v743 = vld [vmem:[%s739 + $0x18] sm:$0xff]
    %v744 = vld [vmem:[%s739 + $0x20] sm:$0xff]
    %v745 = vld [vmem:[%s739 + $0x28] sm:$0xff]
    %v746 = vld [vmem:[%s739 + $0x30] sm:$0xff]
    %v747 = vld [vmem:[%s739 + $0x38] sm:$0xff]
    %v748 = vld [vmem:[%s739 + $0x40] sm:$0xff]
    %v749 = vld [vmem:[%s739 + $0x48] sm:$0xff]
    %v750 = vld [vmem:[%s739 + $0x50] sm:$0xff]
    %v751 = vld [vmem:[%s739 + $0x58] sm:$0xff]
    %v752 = vld [vmem:[%s739 + $0x60] sm:$0xff]
    %v753 = vld [vmem:[%s739 + $0x68] sm:$0xff]
    %v754 = vld [vmem:[%s739 + $0x70] sm:$0xff]
    %v755 = vld [vmem:[%s739 + $0x78] sm:$0xff]
    %756 = vmatprep.subr.mxu0 0.0
    %757 = vmatpush1.msra.mxu0 %v755
    %758 = vmatprep.subr.mxu0 0.0
    %759 = vmatpush1.msra.mxu0 %v754
    %760 = vmatprep.subr.mxu0 0.0
    %761 = vmatpush1.msra.mxu0 %v753
    %762 = vmatprep.subr.mxu0 0.0
    %763 = vmatpush1.msra.mxu0 %v752
    %764 = vmatprep.subr.mxu0 0.0
    %765 = vmatpush1.msra.mxu0 %v751
    %766 = vmatprep.subr.mxu0 0.0
    %767 = vmatpush1.msra.mxu0 %v750
    %768 = vmatprep.subr.mxu0 0.0
    %769 = vmatpush1.msra.mxu0 %v749
    %770 = vmatprep.subr.mxu0 0.0
    %771 = vmatpush1.msra.mxu0 %v748
    %772 = vmatprep.subr.mxu0 0.0
    %773 = vmatpush1.msra.mxu0 %v747
    %774 = vmatprep.subr.mxu0 0.0
    %775 = vmatpush1.msra.mxu0 %v746
    %776 = vmatprep.subr.mxu0 0.0
    %777 = vmatpush1.msra.mxu0 %v745
    %778 = vmatprep.subr.mxu0 0.0
    %779 = vmatpush1.msra.mxu0 %v744
    %780 = vmatprep.subr.mxu0 0.0
    %781 = vmatpush1.msra.mxu0 %v743
    %782 = vmatprep.subr.mxu0 0.0
    %783 = vmatpush1.msra.mxu0 %v742
    %784 = vmatprep.subr.mxu0 0.0
    %785 = vmatpush1.msra.mxu0 %v741
    %786 = vmatprep.subr.mxu0 0.0
    %787 = vmatpush1.msra.mxu0 %v740
    %788 = vmatprep.subr.mxu0 0.0
    %789 = vmatpush2.msra.mxu0 0.0
    %790 = vmatprep.subr.mxu0 0.0
    %791 = vmatpush2.msra.mxu0 0.0
    %792 = vmatprep.subr.mxu0 0.0
    %793 = vmatpush2.msra.mxu0 0.0
    %794 = vmatprep.subr.mxu0 0.0
    %795 = vmatpush2.msra.mxu0 0.0
    %796 = vmatprep.subr.mxu0 0.0
    %797 = vmatpush2.msra.mxu0 0.0
    %798 = vmatprep.subr.mxu0 0.0
    %799 = vmatpush2.msra.mxu0 0.0
    %800 = vmatprep.subr.mxu0 0.0
    %801 = vmatpush2.msra.mxu0 0.0
    %802 = vmatprep.subr.mxu0 0.0
    %803 = vmatpush2.msra.mxu0 0.0
    %804 = vmatprep.subr.mxu0 0.0
    %805 = vmatpush2.msra.mxu0 0.0
    %806 = vmatprep.subr.mxu0 0.0
    %807 = vmatpush2.msra.mxu0 0.0
    %808 = vmatprep.subr.mxu0 0.0
    %809 = vmatpush2.msra.mxu0 0.0
    %810 = vmatprep.subr.mxu0 0.0
    %811 = vmatpush2.msra.mxu0 0.0
    %812 = vmatprep.subr.mxu0 0.0
    %813 = vmatpush2.msra.mxu0 0.0
    %814 = vmatprep.subr.mxu0 0.0
    %815 = vmatpush2.msra.mxu0 0.0
    %816 = vmatprep.subr.mxu0 0.0
    %817 = vmatpush2.msra.mxu0 0.0
    %818 = vmatprep.subr.mxu0 0.0
    %819 = vmatpush2.msra.mxu0 0.0
    %820 = vmatprep.mubr.f32.mxu0 0.0
    %821 = vmatmul.mubr.f32.gmra.mxu0 %v517
    %v822 = vpop.f32.mrf.mxu0
    %v823 = vadd.f32 0.0, %v822
    %v824 = vpop.f32.mrf.mxu0
    %825 = vmatprep.mubr.f32.mxu0 0.0
    %826 = vmatmul.mubr.f32.gmra.mxu0 %v518
    %v827 = vpop.f32.mrf.mxu0
    %v828 = vadd.f32 0.0, %v827
    %v829 = vpop.f32.mrf.mxu0
    %830 = vmatprep.mubr.f32.mxu0 0.0
    %831 = vmatmul.mubr.f32.gmra.mxu0 %v519
    %v832 = vpop.f32.mrf.mxu0
    %v833 = vadd.f32 0.0, %v832
    %v834 = vpop.f32.mrf.mxu0
    %835 = vmatprep.mubr.f32.mxu0 0.0
    %836 = vmatmul.mubr.f32.gmra.mxu0 %v520
    %v837 = vpop.f32.mrf.mxu0
    %v838 = vadd.f32 0.0, %v837
    %v839 = vpop.f32.mrf.mxu0
    %840 = vdwg.mxu0
    %v841 = vadd.f32 %v735, %v823
    %v842 = vadd.f32 %v736, %v828
    %v843 = vadd.f32 %v737, %v833
    %v844 = vadd.f32 %v738, %v838
    %v845 = vadd.f32 %v841, %v62
    %v846 = vadd.f32 %v842, %v63
    %v847 = vadd.f32 %v843, %v64
    %v848 = vadd.f32 %v844, %v65
    %849 = vst [vmem:[#allocation8] sm:$0xff] %v845
    %850 = vst [vmem:[#allocation8 + $0x8] sm:$0xff] %v846
    %851 = vst [vmem:[#allocation8 + $0x10] sm:$0xff] %v847
    %852 = vst [vmem:[#allocation8 + $0x18] sm:$0xff] %v848
    // Predicated region
    $region34: #{tpu_custom_call.1} parent=1 // pred_check
      _
    $region35: #{tpu_custom_call.1} parent=1 // pred_check_branch
      %854 = sbr.rel (0) target = $region37
    $region36: #{tpu_custom_call.1} parent=1 // pred_region
      %s856 = ssub.s32 512, 512
      %857 = vsyncadd [#allocation4], %s856
      %s858 = sshll.u32 [#allocation8], 4
      %s859 = int_to_ptr.vmem [resolvable:$true] %s858
      %864 = dma.vmem_to_hbm [thread:$0]  %s859, 512, %s5, [#allocation4], 128, 128, 8
    $region37: #{tpu_custom_call.1} parent=1 // pred_fallthru
      _
    // Predicated region
    $region38: #{tpu_custom_call.1} parent=1 // pred_check
      _
    $region39: #{tpu_custom_call.1} parent=1 // pred_check_branch
      %866 = sbr.rel (0) target = $region41
    $region40: #{tpu_custom_call.1} parent=1 // pred_region
      %867 = dma.done [#allocation4], 512
    $region41: #{tpu_custom_call.1} parent=1 // pred_fallthru
      _
    %868 = vsyncpa [#allocation3], 1
    %869 = vsyncpa [#allocation6], 1
    %870 = vsyncpa [#allocation4], 1

</llo_original>
